<compile_context>
chip_gen: v7x
topology: tpu7x:2x2x1
jax: 0.10.0
libtpu: 0.0.40
codegen_flags: <defaults>
</compile_context>

<pallas_src>
import jax
import jax.numpy as jnp
from jax import lax
from jax.experimental import pallas as pl
from jax.experimental.pallas import tpu as pltpu

EPS = 1e-6
# 48 MiB scoped VMEM: above every chip's default (16/32 MiB), below v7x's
# 64 MiB physical.  On v5e/v6e (128 MiB physical) this can be raised further.
VMEM_LIMIT = 48 * 1024 * 1024


# ---------------------------------------------------------------------------
# In-kernel helpers (operate on already-loaded arrays)
# ---------------------------------------------------------------------------
def _affine(a, w, b):
    """a @ W + b with f32 accumulation; casts a to the weight dtype (e.g. bf16)
    so the MXU runs in its native precision when weights are bf16."""
    if w.dtype != jnp.float32:
        a = a.astype(w.dtype)
    return jnp.dot(a, w, preferred_element_type=jnp.float32) + b


def _layer_norm(v, gamma, beta):
    """PRPN LayerNorm: gamma*(x-mean)/(std+eps)+beta, unbiased std, eps on std."""
    n = v.shape[-1]
    mean = jnp.mean(v, axis=-1, keepdims=True)
    d = v - mean
    var = jnp.sum(d * d, axis=-1, keepdims=True) * (1.0 / (n - 1))  # unbiased
    inv = pl.reciprocal(jnp.sqrt(var) + EPS)                         # exact EUP path
    return d * (gamma * inv) + beta


def _cell_math(gi_norm, hx, cx, w_hh, b_hh, g_hh, be_hh, g_c, be_c, H):
    """One LSTMCell step.  Gate columns are in packed order [i, f, o | g], so
    sigmoid covers one contiguous 3H slab and tanh one H slab (halves EUP work)."""
    gh = _affine(hx, w_hh, b_hh)
    gates = gi_norm + _layer_norm(gh, g_hh, be_hh)
    sig = jax.nn.sigmoid(gates[:, :3 * H])     # [i | f | o]
    g = jnp.tanh(gates[:, 3 * H:])             # cell gate
    ingate = sig[:, 0 * H:1 * H]
    forgetgate = sig[:, 1 * H:2 * H]
    outgate = sig[:, 2 * H:3 * H]
    cy = forgetgate * cx + ingate * g
    cn = _layer_norm(cy, g_c, be_c)
    hy = outgate * jnp.tanh(cn)
    return hy, cy


# ---------------------------------------------------------------------------
# Kernels
# ---------------------------------------------------------------------------
def lstm_cell_kernel(x_ref, hx_ref, cx_ref,
                     w_ih_ref, b_ih_ref, g_ih_ref, be_ih_ref,
                     w_hh_ref, b_hh_ref, g_hh_ref, be_hh_ref,
                     g_c_ref, be_c_ref,
                     out_ref):
    """Single fused LSTMCell step; output is the [hy | cy] (B, 2H) slab."""
    H = out_ref.shape[-1] // 2
    x = x_ref[...].astype(jnp.float32)
    hx = hx_ref[...].astype(jnp.float32)
    cx = cx_ref[...].astype(jnp.float32)
    gi = _layer_norm(_affine(x, w_ih_ref[...], b_ih_ref[...]),
                     g_ih_ref[...], be_ih_ref[...])
    hy, cy = _cell_math(gi, hx, cx,
                        w_hh_ref[...], b_hh_ref[...], g_hh_ref[...], be_hh_ref[...],
                        g_c_ref[...], be_c_ref[...], H)
    out_ref[:, :H] = hy.astype(out_ref.dtype)   # slice stores, no concat
    out_ref[:, H:] = cy.astype(out_ref.dtype)


def input_proj_kernel(x_ref, w_ih_ref, b_ih_ref, g_ih_ref, be_ih_ref, gi_ref):
    """Non-recurrent LayerNorm(x_t @ W_ih + b_ih) for a block of Tc timesteps.
    The (Tc, B, I) block is flattened to (Tc*B, I) so a single wide matmul
    fills the MXU rows."""
    Tc, B, I = x_ref.shape
    x = x_ref[...].astype(jnp.float32).reshape(Tc * B, I)
    gi = _layer_norm(_affine(x, w_ih_ref[...], b_ih_ref[...]),
                     g_ih_ref[...], be_ih_ref[...])
    gi_ref[...] = gi.reshape(Tc, B, -1).astype(gi_ref.dtype)


def lstm_seq_kernel(gi_ref, hx0_ref, cx0_ref,
                    w_hh_ref, b_hh_ref, g_hh_ref, be_hh_ref,
                    g_c_ref, be_c_ref,
                    out_ref, h_s, c_s):
    """Chunked fused recurrence.

    grid = (batch_blocks ["parallel"], num_chunks ["arbitrary"]).  (h, c) are
    carried across chunks in VMEM scratch; Tc timesteps are processed by an
    in-kernel fori_loop; the (Tc, B, 2H) output slab is written back once per
    chunk by the pipeline."""
    @pl.when(pl.program_id(1) == 0)
    def _():
        h_s[...] = hx0_ref[...].astype(jnp.float32)
        c_s[...] = cx0_ref[...].astype(jnp.float32)

    H = h_s.shape[-1]
    tc = gi_ref.shape[0]

    # Hoist resident weights / LN params out of the time loop.
    w_hh = w_hh_ref[...]
    b_hh = b_hh_ref[...]
    g_hh = g_hh_ref[...]
    be_hh = be_hh_ref[...]
    g_c = g_c_ref[...]
    be_c = be_c_ref[...]

    def step(t, carry):
        gi_t = gi_ref[t].astype(jnp.float32)
        hy, cy = _cell_math(gi_t, h_s[...], c_s[...],
                            w_hh, b_hh, g_hh, be_hh, g_c, be_c, H)
        h_s[...] = hy
        c_s[...] = cy
        out_ref[t, :, :H] = hy.astype(out_ref.dtype)
        out_ref[t, :, H:] = cy.astype(out_ref.dtype)
        return carry

    lax.fori_loop(0, tc, step, 0, unroll=(tc <= 16))


# ---------------------------------------------------------------------------
# Wrappers
# ---------------------------------------------------------------------------
def lstm_cell(x, hx, cx, packed):
    """One LSTMCell.forward step (matches the PyTorch module).  `packed` must
    come from pack_params() (gate columns reordered to [i, f, o, g])."""
    B = x.shape[0]
    H = hx.shape[-1]
    args = (x, hx, cx,
            packed["w_ih"], packed["b_ih"], packed["g_ih"], packed["be_ih"],
            packed["w_hh"], packed["b_hh"], packed["g_hh"], packed["be_hh"],
            packed["g_c"], packed["be_c"])
    vmem = pl.BlockSpec(memory_space=pltpu.MemorySpace.VMEM)
    out = pl.pallas_call(
        lstm_cell_kernel,
        out_shape=jax.ShapeDtypeStruct((B, 2 * H), x.dtype),
        in_specs=[vmem] * len(args),
        out_specs=vmem,
        compiler_params=pltpu.CompilerParams(vmem_limit_bytes=VMEM_LIMIT),
    )(*args)
    return out[:, :H], out[:, H:]


def lstm_sequence(xs, hx, cx, packed, *, tc=32, bb=None, gi_dtype=jnp.bfloat16):
    """Run the cell over xs[t] for t = 0..T-1.  Returns (hs, cs), each (T, B, H).

    tc:       timesteps per chunk (in-kernel fori_loop length / slab size).
    bb:       batch rows per block; grid batch axis is "parallel" so multiple
              blocks shard across TensorCores on v7x.  Default: whole batch.
    gi_dtype: dtype of the stage-1 intermediate (bf16 default halves its two
              full HBM passes; math inside the recurrence stays f32).
    """
    T, B, I = xs.shape
    H = hx.shape[-1]
    G = 4 * H
    if bb is None:
        bb = B
    assert B % bb == 0, "bb must divide B"
    nb = B // bb

    tc = max(1, min(tc, T))
    Tp = pl.cdiv(T, tc) * tc
    if Tp != T:  # pad the tail chunk; padded steps are computed then discarded
        xs = jnp.concatenate(
            [xs, jnp.zeros((Tp - T, B, I), xs.dtype)], axis=0)
    nc = Tp // tc

    # Stage 1: non-recurrent ih projection + LayerNorm, Tc timesteps per block.
    gi = pl.pallas_call(
        input_proj_kernel,
        out_shape=jax.ShapeDtypeStruct((Tp, B, G), gi_dtype),
        grid=(nc,),
        in_specs=[
            pl.BlockSpec((tc, B, I), lambda c: (c, 0, 0)),
            pl.BlockSpec((I, G), lambda c: (0, 0)),
            pl.BlockSpec((1, G), lambda c: (0, 0)),
            pl.BlockSpec((1, G), lambda c: (0, 0)),
            pl.BlockSpec((1, G), lambda c: (0, 0)),
        ],
        out_specs=pl.BlockSpec((tc, B, G), lambda c: (c, 0, 0)),
        compiler_params=pltpu.CompilerParams(
            dimension_semantics=("parallel",),
            vmem_limit_bytes=VMEM_LIMIT),
    )(xs, packed["w_ih"], packed["b_ih"], packed["g_ih"], packed["be_ih"])

    # Stage 2: chunked fused recurrence; W_hh / LN params resident, state in
    # VMEM scratch, one (Tc, bb, 2H) slab writeback per chunk.
    ys = pl.pallas_call(
        lstm_seq_kernel,
        out_shape=jax.ShapeDtypeStruct((Tp, B, 2 * H), xs.dtype),
        grid=(nb, nc),
        in_specs=[
            pl.BlockSpec((tc, bb, G), lambda b, c: (c, b, 0)),   # gi chunk
            pl.BlockSpec((bb, H), lambda b, c: (b, 0)),          # hx0
            pl.BlockSpec((bb, H), lambda b, c: (b, 0)),          # cx0
            pl.BlockSpec((H, G), lambda b, c: (0, 0)),           # W_hh resident
            pl.BlockSpec((1, G), lambda b, c: (0, 0)),           # b_hh
            pl.BlockSpec((1, G), lambda b, c: (0, 0)),           # gamma_hh
            pl.BlockSpec((1, G), lambda b, c: (0, 0)),           # beta_hh
            pl.BlockSpec((1, H), lambda b, c: (0, 0)),           # gamma_c
            pl.BlockSpec((1, H), lambda b, c: (0, 0)),           # beta_c
        ],
        out_specs=pl.BlockSpec((tc, bb, 2 * H), lambda b, c: (c, b, 0)),
        scratch_shapes=[pltpu.VMEM((bb, H), jnp.float32),        # h carry
                        pltpu.VMEM((bb, H), jnp.float32)],       # c carry
        compiler_params=pltpu.CompilerParams(
            dimension_semantics=("parallel", "arbitrary"),
            vmem_limit_bytes=VMEM_LIMIT),
    )(gi, hx, cx,
      packed["w_hh"], packed["b_hh"], packed["g_hh"], packed["be_hh"],
      packed["g_c"], packed["be_c"])

    ys = ys[:T]
    return ys[..., :H], ys[..., H:]


# ---------------------------------------------------------------------------
# Params (PyTorch layout), offline gate packing, pure-JAX reference
# ---------------------------------------------------------------------------
def make_params(key, input_size, hidden_size, weight_dtype=jnp.float32):
    """Params in PyTorch gate order [i, f, g, o]; Linear weights pre-transposed
    to (in, out) so x @ W == PyTorch x @ W.T; 1-D params stored as (1, F)."""
    k1, k2, k3, k4 = jax.random.split(key, 4)
    G = 4 * hidden_size
    return {
        "w_ih": (jax.random.normal(k1, (input_size, G), jnp.float32) * 0.1).astype(weight_dtype),
        "b_ih": jax.random.normal(k2, (1, G), jnp.float32) * 0.1,
        "g_ih": jnp.ones((1, G), jnp.float32),
        "be_ih": jnp.zeros((1, G), jnp.float32),
        "w_hh": (jax.random.normal(k3, (hidden_size, G), jnp.float32) * 0.1).astype(weight_dtype),
        "b_hh": jax.random.normal(k4, (1, G), jnp.float32) * 0.1,
        "g_hh": jnp.ones((1, G), jnp.float32),
        "be_hh": jnp.zeros((1, G), jnp.float32),
        "g_c": jnp.ones((1, hidden_size), jnp.float32),
        "be_c": jnp.zeros((1, hidden_size), jnp.float32),
    }


def _reorder_gate_cols(a, H):
    """PyTorch gate order [i, f, g, o] -> kernel order [i, f, o, g].
    The 4H LayerNorm is invariant under this column permutation provided its
    gamma/beta are permuted identically."""
    return jnp.concatenate(
        [a[..., :2 * H], a[..., 3 * H:4 * H], a[..., 2 * H:3 * H]], axis=-1)


def pack_params(p):
    """Offline repack of gate-dimension params for the kernels."""
    H = p["g_c"].shape[-1]
    packed = dict(p)
    for k in ("w_ih", "b_ih", "g_ih", "be_ih", "w_hh", "b_hh", "g_hh", "be_hh"):
        packed[k] = _reorder_gate_cols(p[k], H)
    return packed


def _layer_norm_ref(v, gamma, beta):
    n = v.shape[-1]
    mean = jnp.mean(v, axis=-1, keepdims=True)
    d = v - mean
    var = jnp.sum(d * d, axis=-1, keepdims=True) / (n - 1)
    return gamma * d / (jnp.sqrt(var) + EPS) + beta


def lstm_cell_ref(x, hx, cx, p):
    """Pure-JAX reference in the original PyTorch gate order."""
    gi = x @ p["w_ih"].astype(jnp.float32) + p["b_ih"]
    gh = hx @ p["w_hh"].astype(jnp.float32) + p["b_hh"]
    gates = (_layer_norm_ref(gi, p["g_ih"], p["be_ih"]) +
             _layer_norm_ref(gh, p["g_hh"], p["be_hh"]))
    H = hx.shape[-1]
    i = jax.nn.sigmoid(gates[:, 0 * H:1 * H])
    f = jax.nn.sigmoid(gates[:, 1 * H:2 * H])
    g = jnp.tanh(gates[:, 2 * H:3 * H])
    o = jax.nn.sigmoid(gates[:, 3 * H:4 * H])
    cy = f * cx + i * g
    hy = o * jnp.tanh(_layer_norm_ref(cy, p["g_c"], p["be_c"]))
    return hy, cy


def lstm_sequence_ref(xs, hx, cx, p):
    hs, cs = [], []
    h, c = hx, cx
    for t in range(xs.shape[0]):
        h, c = lstm_cell_ref(xs[t], h, c, p)
        hs.append(h)
        cs.append(c)
    return jnp.stack(hs), jnp.stack(cs)


# ---------------------------------------------------------------------------
# Demo / self-test
# ---------------------------------------------------------------------------
if __name__ == "__main__":
    B, INPUT, HIDDEN, T = 8, 32, 32, 8
    key = jax.random.PRNGKey(0)
    kx, kh, kc, kp, ks = jax.random.split(key, 5)

    x = jax.random.normal(kx, (B, INPUT), jnp.float32)
    hx = jax.random.normal(kh, (B, HIDDEN), jnp.float32)
    cx = jax.random.normal(kc, (B, HIDDEN), jnp.float32)
    xs = jax.random.normal(ks, (T, B, INPUT), jnp.float32)

    params = make_params(kp, INPUT, HIDDEN)   # PyTorch layout
    packed = pack_params(params)              # kernel layout [i, f, o, g]

    # 1) Single cell step — matches the PyTorch LSTMCell.forward.
    hy, cy = jax.jit(lstm_cell)(x, hx, cx, packed)
    jax.block_until_ready((hy, cy))
    hy_ref, cy_ref = lstm_cell_ref(x, hx, cx, params)
    assert jnp.allclose(hy, hy_ref, atol=1e-5, rtol=1e-5), "single-step hy mismatch"
    assert jnp.allclose(cy, cy_ref, atol=1e-5, rtol=1e-5), "single-step cy mismatch"

    # 2) Chunked fused recurrence, f32 gi intermediate (tight check).
    seq_f32 = jax.jit(
        lambda xs, hx, cx, p: lstm_sequence(xs, hx, cx, p, gi_dtype=jnp.float32))
    hs, cs = seq_f32(xs, hx, cx, packed)
    jax.block_until_ready((hs, cs))
    hs_ref, cs_ref = lstm_sequence_ref(xs, hx, cx, params)
    assert jnp.allclose(hs, hs_ref, atol=1e-4, rtol=1e-4), "sequence hs mismatch"
    assert jnp.allclose(cs, cs_ref, atol=1e-4, rtol=1e-4), "sequence cs mismatch"

    # 3) Performance path: bf16 gi intermediate + bf16 weights on the MXU
    #    (LN / elementwise math stays f32).  Loose check.
    packed_bf16 = dict(packed)
    packed_bf16["w_ih"] = packed["w_ih"].astype(jnp.bfloat16)
    packed_bf16["w_hh"] = packed["w_hh"].astype(jnp.bfloat16)
    hs16, cs16 = jax.jit(lstm_sequence)(xs, hx, cx, packed_bf16)
    jax.block_until_ready((hs16, cs16))
    assert float(jnp.max(jnp.abs(hs16 - hs_ref))) < 0.25, "bf16 path hs diverged"
    assert float(jnp.max(jnp.abs(cs16 - cs_ref))) < 0.25, "bf16 path cs diverged"

    print("KERNEL_OK")
</pallas_src>

<mosaic_0001>
module attributes {stable_mosaic.version = 11 : i64} {
  func.func @lstm_cell_kernel(%arg0: memref<8x32xf32, #tpu.memory_space<vmem>>, %arg1: memref<8x32xf32, #tpu.memory_space<vmem>>, %arg2: memref<8x32xf32, #tpu.memory_space<vmem>>, %arg3: memref<32x128xf32, #tpu.memory_space<vmem>>, %arg4: memref<1x128xf32, #tpu.memory_space<vmem>>, %arg5: memref<1x128xf32, #tpu.memory_space<vmem>>, %arg6: memref<1x128xf32, #tpu.memory_space<vmem>>, %arg7: memref<32x128xf32, #tpu.memory_space<vmem>>, %arg8: memref<1x128xf32, #tpu.memory_space<vmem>>, %arg9: memref<1x128xf32, #tpu.memory_space<vmem>>, %arg10: memref<1x128xf32, #tpu.memory_space<vmem>>, %arg11: memref<1x32xf32, #tpu.memory_space<vmem>>, %arg12: memref<1x32xf32, #tpu.memory_space<vmem>>, %arg13: memref<8x64xf32, #tpu.memory_space<vmem>>) attributes {dimension_semantics = [], scalar_prefetch = 0 : i64, scratch_operands = 0 : i64, tpu.core_type = #tpu.core_type<tc>} {
    %c0 = arith.constant 0 : index
    %c0_0 = arith.constant 0 : index
    %0 = vector.load %arg0[%c0, %c0_0] : memref<8x32xf32, #tpu.memory_space<vmem>>, vector<8x32xf32>
    %c0_1 = arith.constant 0 : index
    %c0_2 = arith.constant 0 : index
    %1 = vector.load %arg1[%c0_1, %c0_2] : memref<8x32xf32, #tpu.memory_space<vmem>>, vector<8x32xf32>
    %c0_3 = arith.constant 0 : index
    %c0_4 = arith.constant 0 : index
    %2 = vector.load %arg2[%c0_3, %c0_4] : memref<8x32xf32, #tpu.memory_space<vmem>>, vector<8x32xf32>
    %c0_5 = arith.constant 0 : index
    %c0_6 = arith.constant 0 : index
    %3 = vector.load %arg3[%c0_5, %c0_6] : memref<32x128xf32, #tpu.memory_space<vmem>>, vector<32x128xf32>
    %c0_7 = arith.constant 0 : index
    %c0_8 = arith.constant 0 : index
    %4 = vector.load %arg4[%c0_7, %c0_8] : memref<1x128xf32, #tpu.memory_space<vmem>>, vector<1x128xf32>
    %cst = arith.constant dense<0.000000e+00> : vector<8x128xf32>
    %5 = tpu.matmul %0, %3, %cst {dimension_numbers = #tpu.dot_dimension_numbers<[1], [0], [0], [1], [0, 0, 1, 1], [], []>} : vector<8x32xf32>, vector<32x128xf32>, vector<8x128xf32> -> vector<8x128xf32>
    %6 = vector.broadcast %4 : vector<1x128xf32> to vector<8x128xf32>
    %7 = arith.addf %5, %6 : vector<8x128xf32>
    %c0_9 = arith.constant 0 : index
    %c0_10 = arith.constant 0 : index
    %8 = vector.load %arg5[%c0_9, %c0_10] : memref<1x128xf32, #tpu.memory_space<vmem>>, vector<1x128xf32>
    %c0_11 = arith.constant 0 : index
    %c0_12 = arith.constant 0 : index
    %9 = vector.load %arg6[%c0_11, %c0_12] : memref<1x128xf32, #tpu.memory_space<vmem>>, vector<1x128xf32>
    %cst_13 = arith.constant dense<0.000000e+00> : vector<8xf32>
    %10 = vector.multi_reduction <add>, %7, %cst_13 [1] : vector<8x128xf32> to vector<8xf32>
    %11 = vector.shape_cast %10 : vector<8xf32> to vector<8x1xf32>
    %cst_14 = arith.constant 1.280000e+02 : f32
    %12 = vector.broadcast %cst_14 : f32 to vector<8x1xf32>
    %13 = arith.divf %11, %12 : vector<8x1xf32>
    %14 = vector.broadcast %13 : vector<8x1xf32> to vector<8x128xf32>
    %15 = arith.subf %7, %14 : vector<8x128xf32>
    %16 = arith.mulf %15, %15 : vector<8x128xf32>
    %cst_15 = arith.constant dense<0.000000e+00> : vector<8xf32>
    %17 = vector.multi_reduction <add>, %16, %cst_15 [1] : vector<8x128xf32> to vector<8xf32>
    %18 = vector.shape_cast %17 : vector<8xf32> to vector<8x1xf32>
    %cst_16 = arith.constant 0.00787401571 : f32
    %19 = vector.broadcast %cst_16 : f32 to vector<8x1xf32>
    %20 = arith.mulf %18, %19 : vector<8x1xf32>
    %21 = math.sqrt %20 : vector<8x1xf32>
    %cst_17 = arith.constant 9.99999997E-7 : f32
    %22 = vector.broadcast %cst_17 : f32 to vector<8x1xf32>
    %23 = arith.addf %21, %22 : vector<8x1xf32>
    %24 = tpu.reciprocal %23 : vector<8x1xf32> -> vector<8x1xf32>
    %25 = vector.broadcast %8 : vector<1x128xf32> to vector<8x128xf32>
    %26 = vector.broadcast %24 : vector<8x1xf32> to vector<8x128xf32>
    %27 = arith.mulf %25, %26 : vector<8x128xf32>
    %28 = arith.mulf %15, %27 : vector<8x128xf32>
    %29 = vector.broadcast %9 : vector<1x128xf32> to vector<8x128xf32>
    %30 = arith.addf %28, %29 : vector<8x128xf32>
    %c0_18 = arith.constant 0 : index
    %c0_19 = arith.constant 0 : index
    %31 = vector.load %arg7[%c0_18, %c0_19] : memref<32x128xf32, #tpu.memory_space<vmem>>, vector<32x128xf32>
    %c0_20 = arith.constant 0 : index
    %c0_21 = arith.constant 0 : index
    %32 = vector.load %arg8[%c0_20, %c0_21] : memref<1x128xf32, #tpu.memory_space<vmem>>, vector<1x128xf32>
    %c0_22 = arith.constant 0 : index
    %c0_23 = arith.constant 0 : index
    %33 = vector.load %arg9[%c0_22, %c0_23] : memref<1x128xf32, #tpu.memory_space<vmem>>, vector<1x128xf32>
    %c0_24 = arith.constant 0 : index
    %c0_25 = arith.constant 0 : index
    %34 = vector.load %arg10[%c0_24, %c0_25] : memref<1x128xf32, #tpu.memory_space<vmem>>, vector<1x128xf32>
    %c0_26 = arith.constant 0 : index
    %c0_27 = arith.constant 0 : index
    %35 = vector.load %arg11[%c0_26, %c0_27] : memref<1x32xf32, #tpu.memory_space<vmem>>, vector<1x32xf32>
    %c0_28 = arith.constant 0 : index
    %c0_29 = arith.constant 0 : index
    %36 = vector.load %arg12[%c0_28, %c0_29] : memref<1x32xf32, #tpu.memory_space<vmem>>, vector<1x32xf32>
    %cst_30 = arith.constant dense<0.000000e+00> : vector<8x128xf32>
    %37 = tpu.matmul %1, %31, %cst_30 {dimension_numbers = #tpu.dot_dimension_numbers<[1], [0], [0], [1], [0, 0, 1, 1], [], []>} : vector<8x32xf32>, vector<32x128xf32>, vector<8x128xf32> -> vector<8x128xf32>
    %38 = vector.broadcast %32 : vector<1x128xf32> to vector<8x128xf32>
    %39 = arith.addf %37, %38 : vector<8x128xf32>
    %cst_31 = arith.constant dense<0.000000e+00> : vector<8xf32>
    %40 = vector.multi_reduction <add>, %39, %cst_31 [1] : vector<8x128xf32> to vector<8xf32>
    %41 = vector.shape_cast %40 : vector<8xf32> to vector<8x1xf32>
    %cst_32 = arith.constant 1.280000e+02 : f32
    %42 = vector.broadcast %cst_32 : f32 to vector<8x1xf32>
    %43 = arith.divf %41, %42 : vector<8x1xf32>
    %44 = vector.broadcast %43 : vector<8x1xf32> to vector<8x128xf32>
    %45 = arith.subf %39, %44 : vector<8x128xf32>
    %46 = arith.mulf %45, %45 : vector<8x128xf32>
    %cst_33 = arith.constant dense<0.000000e+00> : vector<8xf32>
    %47 = vector.multi_reduction <add>, %46, %cst_33 [1] : vector<8x128xf32> to vector<8xf32>
    %48 = vector.shape_cast %47 : vector<8xf32> to vector<8x1xf32>
    %cst_34 = arith.constant 0.00787401571 : f32
    %49 = vector.broadcast %cst_34 : f32 to vector<8x1xf32>
    %50 = arith.mulf %48, %49 : vector<8x1xf32>
    %51 = math.sqrt %50 : vector<8x1xf32>
    %cst_35 = arith.constant 9.99999997E-7 : f32
    %52 = vector.broadcast %cst_35 : f32 to vector<8x1xf32>
    %53 = arith.addf %51, %52 : vector<8x1xf32>
    %54 = tpu.reciprocal %53 : vector<8x1xf32> -> vector<8x1xf32>
    %55 = vector.broadcast %33 : vector<1x128xf32> to vector<8x128xf32>
    %56 = vector.broadcast %54 : vector<8x1xf32> to vector<8x128xf32>
    %57 = arith.mulf %55, %56 : vector<8x128xf32>
    %58 = arith.mulf %45, %57 : vector<8x128xf32>
    %59 = vector.broadcast %34 : vector<1x128xf32> to vector<8x128xf32>
    %60 = arith.addf %58, %59 : vector<8x128xf32>
    %61 = arith.addf %30, %60 : vector<8x128xf32>
    %62 = vector.extract_strided_slice %61 {offsets = [0, 0], sizes = [8, 96], strides = [1, 1]} : vector<8x128xf32> to vector<8x96xf32>
    %63 = arith.negf %62 : vector<8x96xf32>
    %64 = math.exp %63 : vector<8x96xf32>
    %cst_36 = arith.constant 1.000000e+00 : f32
    %65 = vector.broadcast %cst_36 : f32 to vector<8x96xf32>
    %66 = arith.addf %65, %64 : vector<8x96xf32>
    %67 = arith.divf %65, %66 : vector<8x96xf32>
    %68 = vector.extract_strided_slice %61 {offsets = [0, 96], sizes = [8, 32], strides = [1, 1]} : vector<8x128xf32> to vector<8x32xf32>
    %69 = math.tanh %68 : vector<8x32xf32>
    %70 = vector.extract_strided_slice %67 {offsets = [0, 0], sizes = [8, 32], strides = [1, 1]} : vector<8x96xf32> to vector<8x32xf32>
    %71 = vector.extract_strided_slice %67 {offsets = [0, 32], sizes = [8, 32], strides = [1, 1]} : vector<8x96xf32> to vector<8x32xf32>
    %72 = vector.extract_strided_slice %67 {offsets = [0, 64], sizes = [8, 32], strides = [1, 1]} : vector<8x96xf32> to vector<8x32xf32>
    %73 = arith.mulf %71, %2 : vector<8x32xf32>
    %74 = arith.mulf %70, %69 : vector<8x32xf32>
    %75 = arith.addf %73, %74 : vector<8x32xf32>
    %cst_37 = arith.constant dense<0.000000e+00> : vector<8xf32>
    %76 = vector.multi_reduction <add>, %75, %cst_37 [1] : vector<8x32xf32> to vector<8xf32>
    %77 = vector.shape_cast %76 : vector<8xf32> to vector<8x1xf32>
    %cst_38 = arith.constant 3.200000e+01 : f32
    %78 = vector.broadcast %cst_38 : f32 to vector<8x1xf32>
    %79 = arith.divf %77, %78 : vector<8x1xf32>
    %80 = vector.broadcast %79 : vector<8x1xf32> to vector<8x32xf32>
    %81 = arith.subf %75, %80 : vector<8x32xf32>
    %82 = arith.mulf %81, %81 : vector<8x32xf32>
    %cst_39 = arith.constant dense<0.000000e+00> : vector<8xf32>
    %83 = vector.multi_reduction <add>, %82, %cst_39 [1] : vector<8x32xf32> to vector<8xf32>
    %84 = vector.shape_cast %83 : vector<8xf32> to vector<8x1xf32>
    %cst_40 = arith.constant 0.0322580636 : f32
    %85 = vector.broadcast %cst_40 : f32 to vector<8x1xf32>
    %86 = arith.mulf %84, %85 : vector<8x1xf32>
    %87 = math.sqrt %86 : vector<8x1xf32>
    %cst_41 = arith.constant 9.99999997E-7 : f32
    %88 = vector.broadcast %cst_41 : f32 to vector<8x1xf32>
    %89 = arith.addf %87, %88 : vector<8x1xf32>
    %90 = tpu.reciprocal %89 : vector<8x1xf32> -> vector<8x1xf32>
    %91 = vector.broadcast %35 : vector<1x32xf32> to vector<8x32xf32>
    %92 = vector.broadcast %90 : vector<8x1xf32> to vector<8x32xf32>
    %93 = arith.mulf %91, %92 : vector<8x32xf32>
    %94 = arith.mulf %81, %93 : vector<8x32xf32>
    %95 = vector.broadcast %36 : vector<1x32xf32> to vector<8x32xf32>
    %96 = arith.addf %94, %95 : vector<8x32xf32>
    %97 = math.tanh %96 : vector<8x32xf32>
    %98 = arith.mulf %72, %97 : vector<8x32xf32>
    %c0_42 = arith.constant 0 : index
    %c0_43 = arith.constant 0 : index
    %99 = vector.load %arg13[%c0_42, %c0_43] : memref<8x64xf32, #tpu.memory_space<vmem>>, vector<8x32xf32>
    tpu.vector_store %arg13[%c0_42, %c0_43], %98 {strides = array<i32>} : memref<8x64xf32, #tpu.memory_space<vmem>>, vector<8x32xf32>,
    %c0_44 = arith.constant 0 : index
    %c32 = arith.constant 32 : index
    %100 = vector.load %arg13[%c0_44, %c32] : memref<8x64xf32, #tpu.memory_space<vmem>>, vector<8x32xf32>
    tpu.vector_store %arg13[%c0_44, %c32], %75 {strides = array<i32>} : memref<8x64xf32, #tpu.memory_space<vmem>>, vector<8x32xf32>,
    return
  }
}

</mosaic_0001>

<llo_original>
// kernel: lstm_cell.1
$region0: #{lstm_cell.1}
  #allocation0 [shape = 'u32[]', space=smem, size = 0x4, offset = 0x4, fixed_abs, tag = 'smem constant byte address 0x4 - core index']
  #allocation1 [shape = 'u32[144,128]{1,0:T(1,128)}', space=vmem, size = 0x12000, scoped, tag = 'internal scratch']
  %s0 = inlined_call_operand.hbm [shape: f32[8,32], index: 0, kind: input, shape index: {}]
  %s1 = inlined_call_operand.hbm [shape: f32[8,32], index: 1, kind: input, shape index: {}]
  %s2 = inlined_call_operand.hbm [shape: f32[8,32], index: 2, kind: input, shape index: {}]
  %s3 = inlined_call_operand.vmem [shape: f32[32,128], index: 3, kind: input, shape index: {}]
  %s4 = inlined_call_operand.vmem [shape: f32[1,128], index: 4, kind: input, shape index: {}]
  %s5 = inlined_call_operand.vmem [shape: f32[1,128], index: 5, kind: input, shape index: {}]
  %s6 = inlined_call_operand.vmem [shape: f32[1,128], index: 6, kind: input, shape index: {}]
  %s7 = inlined_call_operand.hbm [shape: f32[32,128], index: 7, kind: input, shape index: {}]
  %s8 = inlined_call_operand.vmem [shape: f32[1,128], index: 8, kind: input, shape index: {}]
  %s9 = inlined_call_operand.vmem [shape: f32[1,128], index: 9, kind: input, shape index: {}]
  %s10 = inlined_call_operand.vmem [shape: f32[1,128], index: 10, kind: input, shape index: {}]
  %s11 = inlined_call_operand.vmem [shape: f32[1,32], index: 11, kind: input, shape index: {}]
  %s12 = inlined_call_operand.vmem [shape: f32[1,32], index: 12, kind: input, shape index: {}]
  %s13 = inlined_call_operand.vmem [shape: f32[8,64], index: 13, kind: output, shape index: {}]
  %s14 = sld [smem:[#allocation0]]
  $region78: #{lstm_cell.1} parent=0
    _
  %s16 = ssub.s32 1, %s14
  %s17 = scalar_select 0, %s16, %s14
  $region1: #{lstm_cell.1} parent=0
    #allocation2 [shape = 'u8[4096]{0}', space=vmem, size = 0x1000, scoped, tag = 'input window, operand 0, single buffered']
    #allocation3 [shape = 's32[1]{0}', space=sflag, size = 0x4, scoped, tag = 'scoped memory for lstm_cell.1']
    #allocation4 [shape = 'u8[4096]{0}', space=vmem, size = 0x1000, scoped, tag = 'input window, operand 1, single buffered']
    #allocation5 [shape = 's32[1]{0}', space=sflag, size = 0x4, scoped, tag = 'scoped memory for lstm_cell.1']
    #allocation6 [shape = 'u8[4096]{0}', space=vmem, size = 0x1000, scoped, tag = 'input window, operand 2, single buffered']
    #allocation7 [shape = 'u8[16384]{0}', space=vmem, size = 0x4000, scoped, tag = 'input window, operand 7, single buffered']
    #allocation8 [shape = 's32[1]{0}', space=sflag, size = 0x4, scoped, tag = 'scoped memory for lstm_cell.1']
    %18 = vsyncpa [#allocation3], 0
    %19 = vsyncpa [#allocation5], 0
    %20 = vsyncpa [#allocation8], 0
    // Predicated region
    $region2: #{lstm_cell.1} parent=1 // pred_check
      _
    $region3: #{lstm_cell.1} parent=1 // pred_check_branch
      %22 = sbr.rel (0) target = $region5
    $region4: #{lstm_cell.1} parent=1 // pred_region
      %s24 = ssub.s32 128, 128
      %25 = vsyncadd [#allocation3], %s24
      %s27 = sshll.u32 [#allocation2], 4
      %s28 = int_to_ptr.vmem [resolvable:$true] %s27
      %30 = dma.hbm_to_vmem [thread:$0]  %s0, 128, %s28, [#allocation3]
    $region5: #{lstm_cell.1} parent=1 // pred_fallthru
      _
    // Predicated region
    $region6: #{lstm_cell.1} parent=1 // pred_check
      _
    $region7: #{lstm_cell.1} parent=1 // pred_check_branch
      %32 = sbr.rel (0) target = $region9
    $region8: #{lstm_cell.1} parent=1 // pred_region
      %s34 = ssub.s32 128, 128
      %35 = vsyncadd [#allocation5], %s34
      %s37 = sshll.u32 [#allocation4], 4
      %s38 = int_to_ptr.vmem [resolvable:$true] %s37
      %40 = dma.hbm_to_vmem [thread:$0]  %s1, 128, %s38, [#allocation5]
    $region9: #{lstm_cell.1} parent=1 // pred_fallthru
      _
    // Predicated region
    $region10: #{lstm_cell.1} parent=1 // pred_check
      _
    $region11: #{lstm_cell.1} parent=1 // pred_check_branch
      %42 = sbr.rel (0) target = $region13
    $region12: #{lstm_cell.1} parent=1 // pred_region
      %s44 = ssub.s32 128, 128
      %45 = vsyncadd [#allocation5], %s44
      %s47 = sshll.u32 [#allocation6], 4
      %s48 = int_to_ptr.vmem [resolvable:$true] %s47
      %50 = dma.hbm_to_vmem [thread:$0]  %s2, 128, %s48, [#allocation5]
    $region13: #{lstm_cell.1} parent=1 // pred_fallthru
      _
    // Predicated region
    $region14: #{lstm_cell.1} parent=1 // pred_check
      _
    $region15: #{lstm_cell.1} parent=1 // pred_check_branch
      %52 = sbr.rel (0) target = $region17
    $region16: #{lstm_cell.1} parent=1 // pred_region
      _
    $region17: #{lstm_cell.1} parent=1 // pred_fallthru
      _
    // Predicated region
    $region18: #{lstm_cell.1} parent=1 // pred_check
      _
    $region19: #{lstm_cell.1} parent=1 // pred_check_branch
      %54 = sbr.rel (0) target = $region21
    $region20: #{lstm_cell.1} parent=1 // pred_region
      _
    $region21: #{lstm_cell.1} parent=1 // pred_fallthru
      _
    // Predicated region
    $region22: #{lstm_cell.1} parent=1 // pred_check
      _
    $region23: #{lstm_cell.1} parent=1 // pred_check_branch
      %56 = sbr.rel (0) target = $region25
    $region24: #{lstm_cell.1} parent=1 // pred_region
      _
    $region25: #{lstm_cell.1} parent=1 // pred_fallthru
      _
    // Predicated region
    $region26: #{lstm_cell.1} parent=1 // pred_check
      _
    $region27: #{lstm_cell.1} parent=1 // pred_check_branch
      %58 = sbr.rel (0) target = $region29
    $region28: #{lstm_cell.1} parent=1 // pred_region
      _
    $region29: #{lstm_cell.1} parent=1 // pred_fallthru
      _
    // Predicated region
    $region30: #{lstm_cell.1} parent=1 // pred_check
      _
    $region31: #{lstm_cell.1} parent=1 // pred_check_branch
      %60 = sbr.rel (0) target = $region33
    $region32: #{lstm_cell.1} parent=1 // pred_region
      %s62 = ssub.s32 512, 512
      %63 = vsyncadd [#allocation8], %s62
      %s64 = sshll.u32 [#allocation7], 4
      %s65 = int_to_ptr.vmem [resolvable:$true] %s64
      %70 = dma.hbm_to_vmem [thread:$0]  %s7, 512, %s65, [#allocation8], 128, 128, 8
    $region33: #{lstm_cell.1} parent=1 // pred_fallthru
      _
    // Predicated region
    $region34: #{lstm_cell.1} parent=1 // pred_check
      _
    $region35: #{lstm_cell.1} parent=1 // pred_check_branch
      %72 = sbr.rel (0) target = $region37
    $region36: #{lstm_cell.1} parent=1 // pred_region
      _
    $region37: #{lstm_cell.1} parent=1 // pred_fallthru
      _
    // Predicated region
    $region38: #{lstm_cell.1} parent=1 // pred_check
      _
    $region39: #{lstm_cell.1} parent=1 // pred_check_branch
      %74 = sbr.rel (0) target = $region41
    $region40: #{lstm_cell.1} parent=1 // pred_region
      _
    $region41: #{lstm_cell.1} parent=1 // pred_fallthru
      _
    // Predicated region
    $region42: #{lstm_cell.1} parent=1 // pred_check
      _
    $region43: #{lstm_cell.1} parent=1 // pred_check_branch
      %76 = sbr.rel (0) target = $region45
    $region44: #{lstm_cell.1} parent=1 // pred_region
      _
    $region45: #{lstm_cell.1} parent=1 // pred_fallthru
      _
    // Predicated region
    $region46: #{lstm_cell.1} parent=1 // pred_check
      _
    $region47: #{lstm_cell.1} parent=1 // pred_check_branch
      %78 = sbr.rel (0) target = $region49
    $region48: #{lstm_cell.1} parent=1 // pred_region
      _
    $region49: #{lstm_cell.1} parent=1 // pred_fallthru
      _
    // Predicated region
    $region50: #{lstm_cell.1} parent=1 // pred_check
      _
    $region51: #{lstm_cell.1} parent=1 // pred_check_branch
      %80 = sbr.rel (0) target = $region53
    $region52: #{lstm_cell.1} parent=1 // pred_region
      _
    $region53: #{lstm_cell.1} parent=1 // pred_fallthru
      _
    // Predicated region
    $region54: #{lstm_cell.1} parent=1 // pred_check
      _
    $region55: #{lstm_cell.1} parent=1 // pred_check_branch
      %82 = sbr.rel (0) target = $region57
    $region56: #{lstm_cell.1} parent=1 // pred_region
      %83 = dma.done [#allocation3], 128
    $region57: #{lstm_cell.1} parent=1 // pred_fallthru
      _
    // Predicated region
    $region58: #{lstm_cell.1} parent=1 // pred_check
      _
    $region59: #{lstm_cell.1} parent=1 // pred_check_branch
      %85 = sbr.rel (0) target = $region61
    $region60: #{lstm_cell.1} parent=1 // pred_region
      %86 = dma.done [#allocation5], 128
    $region61: #{lstm_cell.1} parent=1 // pred_fallthru
      _
    // Predicated region
    $region62: #{lstm_cell.1} parent=1 // pred_check
      _
    $region63: #{lstm_cell.1} parent=1 // pred_check_branch
      %88 = sbr.rel (0) target = $region65
    $region64: #{lstm_cell.1} parent=1 // pred_region
      %89 = dma.done [#allocation5], 128
    $region65: #{lstm_cell.1} parent=1 // pred_fallthru
      _
    // Predicated region
    $region66: #{lstm_cell.1} parent=1 // pred_check
      _
    $region67: #{lstm_cell.1} parent=1 // pred_check_branch
      %91 = sbr.rel (0) target = $region69
    $region68: #{lstm_cell.1} parent=1 // pred_region
      %92 = dma.done [#allocation8], 512
    $region69: #{lstm_cell.1} parent=1 // pred_fallthru
      _
    %v93 = vld [vmem:[#allocation2] sm:$0xff]
    %v94 = vld [vmem:[#allocation4] sm:$0xff]
    %v95 = vld [vmem:[#allocation6] sm:$0xff]
    %v96 = vld [vmem:[%s3] sm:$0xff]
    %v97 = vld [vmem:[%s3 + $0x8] sm:$0xff]
    %v98 = vld [vmem:[%s3 + $0x10] sm:$0xff]
    %v99 = vld [vmem:[%s3 + $0x18] sm:$0xff]
    %v100 = vld [vmem:[%s4] sm:$0x1]
    %v102 = vlaneseq
    %v103 = vshrl.u32 %v102, 7
    %v104 = vsub.s32 0, %v103
    %v105 = vrot.slane %v100, %v104
    %vm107 = vcmask 261120
    %v109 = vsel %vm107, %v93, 0
    %111 = vmatprep.subr.mxu0 0.0
    %112 = vmatpush1.msra.mxu0 %v96
    %113 = vmatprep.subr.mxu0 0.0
    %114 = vmatpush1.msra.mxu0 %v97
    %115 = vmatprep.subr.mxu0 0.0
    %116 = vmatpush1.msra.mxu0 %v98
    %117 = vmatprep.subr.mxu0 0.0
    %118 = vmatpush1.msra.mxu0 %v99
    %119 = vmatprep.subr.mxu0 0.0
    %120 = vmatpush1.msra.mxu0 0.0
    %121 = vmatprep.subr.mxu0 0.0
    %122 = vmatpush1.msra.mxu0 0.0
    %123 = vmatprep.subr.mxu0 0.0
    %124 = vmatpush1.msra.mxu0 0.0
    %125 = vmatprep.subr.mxu0 0.0
    %126 = vmatpush1.msra.mxu0 0.0
    %127 = vmatprep.subr.mxu0 0.0
    %128 = vmatpush1.msra.mxu0 0.0
    %129 = vmatprep.subr.mxu0 0.0
    %130 = vmatpush1.msra.mxu0 0.0
    %131 = vmatprep.subr.mxu0 0.0
    %132 = vmatpush1.msra.mxu0 0.0
    %133 = vmatprep.subr.mxu0 0.0
    %134 = vmatpush1.msra.mxu0 0.0
    %135 = vmatprep.subr.mxu0 0.0
    %136 = vmatpush1.msra.mxu0 0.0
    %137 = vmatprep.subr.mxu0 0.0
    %138 = vmatpush1.msra.mxu0 0.0
    %139 = vmatprep.subr.mxu0 0.0
    %140 = vmatpush1.msra.mxu0 0.0
    %141 = vmatprep.subr.mxu0 0.0
    %142 = vmatpush1.msra.mxu0 0.0
    %143 = vmatprep.subr.mxu0 0.0
    %144 = vmatpush1.msra.mxu0 0.0
    %145 = vmatprep.subr.mxu0 0.0
    %146 = vmatpush1.msra.mxu0 0.0
    %147 = vmatprep.subr.mxu0 0.0
    %148 = vmatpush1.msra.mxu0 0.0
    %149 = vmatprep.subr.mxu0 0.0
    %150 = vmatpush1.msra.mxu0 0.0
    %151 = vmatprep.subr.mxu0 0.0
    %152 = vmatpush1.msra.mxu0 0.0
    %153 = vmatprep.subr.mxu0 0.0
    %154 = vmatpush1.msra.mxu0 0.0
    %155 = vmatprep.subr.mxu0 0.0
    %156 = vmatpush1.msra.mxu0 0.0
    %157 = vmatprep.subr.mxu0 0.0
    %158 = vmatpush1.msra.mxu0 0.0
    %159 = vmatprep.subr.mxu0 0.0
    %160 = vmatpush1.msra.mxu0 0.0
    %161 = vmatprep.subr.mxu0 0.0
    %162 = vmatpush1.msra.mxu0 0.0
    %163 = vmatprep.subr.mxu0 0.0
    %164 = vmatpush1.msra.mxu0 0.0
    %165 = vmatprep.subr.mxu0 0.0
    %166 = vmatpush1.msra.mxu0 0.0
    %167 = vmatprep.subr.mxu0 0.0
    %168 = vmatpush1.msra.mxu0 0.0
    %169 = vmatprep.subr.mxu0 0.0
    %170 = vmatpush1.msra.mxu0 0.0
    %171 = vmatprep.subr.mxu0 0.0
    %172 = vmatpush1.msra.mxu0 0.0
    %173 = vmatprep.subr.mxu0 0.0
    %174 = vmatpush1.msra.mxu0 0.0
    %175 = vmatprep.mubr.f32.mxu0 0.0
    %176 = vmatmul.mubr.f32.gmra.mrb[0].mxu0 %v109
    %v177 = vpop.f32.mrb[0].mxu0
    %v178 = vadd.f32 %v105, %v177
    %v179 = vpop.f32.mrb[0].mxu0
    %180 = vdwg.mxu0
    %v181 = vld [vmem:[%s5] sm:$0x1]
    %v182 = vld [vmem:[%s6] sm:$0x1]
    %183 = vadd.xlane.f32.xlu0 %v178
    %v184 = vpop.xlane.xlu0 %183
    %v185 = vrcp.pop 128.0
    %v186 = vmul.f32 %v184, %v185
    %v187 = vsub.f32 %v178, %v186
    %v188 = vmul.f32 %v187, %v187
    %189 = vadd.xlane.f32.xlu0 %v188
    %v190 = vpop.xlane.xlu0 %189
    %v191 = vmul.f32 %v190, 0.007874016
    %v192 = vrsqrt.pop %v191
    %v193 = vmul.f32 %v191, %v192
    %vm194 = vcmp.eq.f32.partialorder %v191, inf
    %v195 = vsel %vm194, %v191, %v193
    %vm196 = vcmp.eq.f32.partialorder %v191, 0.0
    %v197 = vand.u32 %v191, 2147483648
    %v198 = vsel %vm196, %v197, %v195
    %v199 = vadd.f32 %v198, 1e-06
    %v200 = vrcp.pop %v199
    %v202 = vlaneseq
    %v203 = vshrl.u32 %v202, 7
    %v204 = vsub.s32 0, %v203
    %v205 = vrot.slane %v181, %v204
    %v207 = vmul.f32 %v205, %v200
    %v208 = vmul.f32 %v187, %v207
    %v210 = vlaneseq
    %v211 = vshrl.u32 %v210, 7
    %v212 = vsub.s32 0, %v211
    %v213 = vrot.slane %v182, %v212
    %v215 = vadd.f32 %v208, %v213
    %v216 = vld [vmem:[#allocation7] sm:$0xff]
    %v217 = vld [vmem:[#allocation7 + $0x8] sm:$0xff]
    %v218 = vld [vmem:[#allocation7 + $0x10] sm:$0xff]
    %v219 = vld [vmem:[#allocation7 + $0x18] sm:$0xff]
    %v220 = vld [vmem:[%s8] sm:$0x1]
    %v221 = vld [vmem:[%s9] sm:$0x1]
    %v222 = vld [vmem:[%s10] sm:$0x1]
    %v223 = vld [vmem:[%s11] sm:$0x1]
    %v224 = vld [vmem:[%s12] sm:$0x1]
    %v226 = vlaneseq
    %v227 = vshrl.u32 %v226, 7
    %v228 = vsub.s32 0, %v227
    %v229 = vrot.slane %v220, %v228
    %v232 = vsel %vm107, %v94, 0
    %234 = vmatprep.subr.mxu0 0.0
    %235 = vmatpush1.msra.mxu0 %v216
    %236 = vmatprep.subr.mxu0 0.0
    %237 = vmatpush1.msra.mxu0 %v217
    %238 = vmatprep.subr.mxu0 0.0
    %239 = vmatpush1.msra.mxu0 %v218
    %240 = vmatprep.subr.mxu0 0.0
    %241 = vmatpush1.msra.mxu0 %v219
    %242 = vmatprep.subr.mxu0 0.0
    %243 = vmatpush1.msra.mxu0 0.0
    %244 = vmatprep.subr.mxu0 0.0
    %245 = vmatpush1.msra.mxu0 0.0
    %246 = vmatprep.subr.mxu0 0.0
    %247 = vmatpush1.msra.mxu0 0.0
    %248 = vmatprep.subr.mxu0 0.0
    %249 = vmatpush1.msra.mxu0 0.0
    %250 = vmatprep.subr.mxu0 0.0
    %251 = vmatpush1.msra.mxu0 0.0
    %252 = vmatprep.subr.mxu0 0.0
    %253 = vmatpush1.msra.mxu0 0.0
    %254 = vmatprep.subr.mxu0 0.0
    %255 = vmatpush1.msra.mxu0 0.0
    %256 = vmatprep.subr.mxu0 0.0
    %257 = vmatpush1.msra.mxu0 0.0
    %258 = vmatprep.subr.mxu0 0.0
    %259 = vmatpush1.msra.mxu0 0.0
    %260 = vmatprep.subr.mxu0 0.0
    %261 = vmatpush1.msra.mxu0 0.0
    %262 = vmatprep.subr.mxu0 0.0
    %263 = vmatpush1.msra.mxu0 0.0
    %264 = vmatprep.subr.mxu0 0.0
    %265 = vmatpush1.msra.mxu0 0.0
    %266 = vmatprep.subr.mxu0 0.0
    %267 = vmatpush1.msra.mxu0 0.0
    %268 = vmatprep.subr.mxu0 0.0
    %269 = vmatpush1.msra.mxu0 0.0
    %270 = vmatprep.subr.mxu0 0.0
    %271 = vmatpush1.msra.mxu0 0.0
    %272 = vmatprep.subr.mxu0 0.0
    %273 = vmatpush1.msra.mxu0 0.0
    %274 = vmatprep.subr.mxu0 0.0
    %275 = vmatpush1.msra.mxu0 0.0
    %276 = vmatprep.subr.mxu0 0.0
    %277 = vmatpush1.msra.mxu0 0.0
    %278 = vmatprep.subr.mxu0 0.0
    %279 = vmatpush1.msra.mxu0 0.0
    %280 = vmatprep.subr.mxu0 0.0
    %281 = vmatpush1.msra.mxu0 0.0
    %282 = vmatprep.subr.mxu0 0.0
    %283 = vmatpush1.msra.mxu0 0.0
    %284 = vmatprep.subr.mxu0 0.0
    %285 = vmatpush1.msra.mxu0 0.0
    %286 = vmatprep.subr.mxu0 0.0
    %287 = vmatpush1.msra.mxu0 0.0
    %288 = vmatprep.subr.mxu0 0.0
    %289 = vmatpush1.msra.mxu0 0.0
    %290 = vmatprep.subr.mxu0 0.0
    %291 = vmatpush1.msra.mxu0 0.0
    %292 = vmatprep.subr.mxu0 0.0
    %293 = vmatpush1.msra.mxu0 0.0
    %294 = vmatprep.subr.mxu0 0.0
    %295 = vmatpush1.msra.mxu0 0.0
    %296 = vmatprep.subr.mxu0 0.0
    %297 = vmatpush1.msra.mxu0 0.0
    %298 = vmatprep.mubr.f32.mxu0 0.0
    %299 = vmatmul.mubr.f32.gmra.mrb[0].mxu0 %v232
    %v300 = vpop.f32.mrb[0].mxu0
    %v301 = vadd.f32 %v229, %v300
    %v302 = vpop.f32.mrb[0].mxu0
    %303 = vdwg.mxu0
    %304 = vadd.xlane.f32.xlu0 %v301
    %v305 = vpop.xlane.xlu0 %304
    %v306 = vmul.f32 %v305, %v185
    %v307 = vsub.f32 %v301, %v306
    %v308 = vmul.f32 %v307, %v307
    %309 = vadd.xlane.f32.xlu0 %v308
    %v310 = vpop.xlane.xlu0 %309
    %v311 = vmul.f32 %v310, 0.007874016
    %v312 = vrsqrt.pop %v311
    %v313 = vmul.f32 %v311, %v312
    %vm314 = vcmp.eq.f32.partialorder %v311, inf
    %v315 = vsel %vm314, %v311, %v313
    %vm316 = vcmp.eq.f32.partialorder %v311, 0.0
    %v317 = vand.u32 %v311, 2147483648
    %v318 = vsel %vm316, %v317, %v315
    %v319 = vadd.f32 %v318, 1e-06
    %v320 = vrcp.pop %v319
    %v322 = vlaneseq
    %v323 = vshrl.u32 %v322, 7
    %v324 = vsub.s32 0, %v323
    %v325 = vrot.slane %v221, %v324
    %v327 = vmul.f32 %v325, %v320
    %v328 = vmul.f32 %v307, %v327
    %v330 = vlaneseq
    %v331 = vshrl.u32 %v330, 7
    %v332 = vsub.s32 0, %v331
    %v333 = vrot.slane %v222, %v332
    %v335 = vadd.f32 %v328, %v333
    %v336 = vadd.f32 %v215, %v335
    %v337 = vxor.u32 %v336, 2147483648
    %v338 = vmul.f32 %v337, 1.442695
    %v339 = vpow.pop %v338
    %v340 = vadd.f32 %v339, 1.0
    %v341 = vrcp.pop %v340
    %v342 = vmul.f32 1.0, %v341
    %v343 = vtanh.pop %v336
    %345 = vrot.lane.b32.xlu0 %v95, 32
    %v346 = vpop.permute.xlu0 %345
    %v348 = vmul.f32 %v342, %v346
    %350 = vrot.lane.b32.xlu0 %v343, 32
    %v351 = vpop.permute.xlu0 %350
    %v353 = vmul.f32 %v342, %v351
    %355 = vrot.lane.b32.xlu0 %v353, 32
    %v356 = vpop.permute.xlu0 %355
    %v358 = vadd.f32 %v348, %v356
    %360 = vrot.lane.b32.xlu0 %v358, 96
    %v361 = vpop.permute.xlu0 %360
    %v363 = vsel %vm107, %v361, 0.0
    %364 = vadd.xlane.f32.xlu0 %v363
    %v365 = vpop.xlane.xlu0 %364
    %v366 = vrcp.pop 32.0
    %v367 = vmul.f32 %v365, %v366
    %v368 = vsub.f32 %v358, %v367
    %v369 = vmul.f32 %v368, %v368
    %371 = vrot.lane.b32.xlu0 %v369, 96
    %v372 = vpop.permute.xlu0 %371
    %v374 = vsel %vm107, %v372, 0.0
    %375 = vadd.xlane.f32.xlu0 %v374
    %v376 = vpop.xlane.xlu0 %375
    %v377 = vmul.f32 %v376, 0.032258064
    %v378 = vrsqrt.pop %v377
    %v379 = vmul.f32 %v377, %v378
    %vm380 = vcmp.eq.f32.partialorder %v377, inf
    %v381 = vsel %vm380, %v377, %v379
    %vm382 = vcmp.eq.f32.partialorder %v377, 0.0
    %v383 = vand.u32 %v377, 2147483648
    %v384 = vsel %vm382, %v383, %v381
    %v385 = vadd.f32 %v384, 1e-06
    %v386 = vrcp.pop %v385
    %v388 = vlaneseq
    %v389 = vshrl.u32 %v388, 7
    %v390 = vsub.s32 0, %v389
    %v391 = vrot.slane %v223, %v390
    %v393 = vmul.f32 %v391, %v386
    %395 = vrot.lane.b32.xlu0 %v393, 32
    %v396 = vpop.permute.xlu0 %395
    %v398 = vmul.f32 %v368, %v396
    %v400 = vlaneseq
    %v401 = vshrl.u32 %v400, 7
    %v402 = vsub.s32 0, %v401
    %v403 = vrot.slane %v224, %v402
    %404 = vrot.lane.b32.xlu0 %v403, 32
    %v405 = vpop.permute.xlu0 %404
    %v407 = vadd.f32 %v398, %v405
    %v408 = vtanh.pop %v407
    %410 = vrot.lane.b32.xlu0 %v408, 32
    %v411 = vpop.permute.xlu0 %410
    %v413 = vmul.f32 %v342, %v411
    %415 = vrot.lane.b32.xlu0 %v413, 64
    %v416 = vpop.permute.xlu0 %415
    %418 = vst.msk [vmem:[%s13] sm:$0xff] %vm107, %v416
    %vm419 = vcmask 523520
    %420 = vst.msk [vmem:[%s13] sm:$0xff] %vm419, %v358
    // Predicated region
    $region70: #{lstm_cell.1} parent=1 // pred_check
      _
    $region71: #{lstm_cell.1} parent=1 // pred_check_branch
      %422 = sbr.rel (0) target = $region73
    $region72: #{lstm_cell.1} parent=1 // pred_region
      _
    $region73: #{lstm_cell.1} parent=1 // pred_fallthru
      _
    // Predicated region
    $region74: #{lstm_cell.1} parent=1 // pred_check
      _
    $region75: #{lstm_cell.1} parent=1 // pred_check_branch
      %424 = sbr.rel (0) target = $region77
    $region76: #{lstm_cell.1} parent=1 // pred_region
      _
    $region77: #{lstm_cell.1} parent=1 // pred_fallthru
      _
    %425 = vsyncpa [#allocation3], 1
    %426 = vsyncpa [#allocation5], 1
    %427 = vsyncpa [#allocation8], 1

</llo_original>
